<compile_context>
chip_gen: v7x
topology: tpu7x:2x2x1
jax: 0.10.0
libtpu: 0.0.40
codegen_flags: <defaults>
</compile_context>

<pallas_src>
import functools

import jax
import jax.numpy as jnp
from jax.experimental import pallas as pl
from jax.experimental.pallas import tpu as pltpu

EPS = 1e-5  # nn.LayerNorm default


def _round_up(n, m):
    return (n + m - 1) // m * m


def _post_layernorm_kernel(x_ref, w_ref, b_ref, g_ref, beta_ref, o_ref, *, d_true):
    # x_ref:    (TM, Dp)  tile of flattened input rows (padded feature dim)
    # w_ref:    (Dp, Dp)  func (Linear) weight, y = x @ w   (zero-padded)
    # b_ref:    (1, Dp)   func (Linear) bias                 (zero-padded)
    # g_ref:    (1, Dp)   LayerNorm gamma                    (zero-padded)
    # beta_ref: (1, Dp)   LayerNorm beta                     (zero-padded)
    x = x_ref[...]

    # func(x): MXU matmul, native-dtype operands, f32 accumulate.
    fx = jnp.dot(x, w_ref[...], preferred_element_type=jnp.float32)

    # residual add (LN math in f32). Padded columns of z are exactly zero:
    # padded x cols are 0, padded w rows/cols are 0, padded bias is 0.
    z = fx + b_ref[...].astype(jnp.float32) + x.astype(jnp.float32)

    d_pad = z.shape[-1]
    inv_d = jnp.float32(1.0 / d_true)

    # mean over the true feature dim (padded lanes contribute exact zeros)
    mean = jnp.sum(z, axis=-1, keepdims=True) * inv_d
    centered = z - mean

    # variance: mask the padded lanes (there centered == -mean, not 0)
    if d_pad != d_true:
        col = jax.lax.broadcasted_iota(jnp.int32, (1, d_pad), 1)
        centered_sq = jnp.where(col < d_true, centered, 0.0)
    else:
        centered_sq = centered
    var = jnp.sum(centered_sq * centered_sq, axis=-1, keepdims=True) * inv_d

    inv_std = jax.lax.rsqrt(var + EPS)  # EUP slot, off the VALU critical path
    out = (centered * inv_std) * g_ref[...].astype(jnp.float32) \
          + beta_ref[...].astype(jnp.float32)

    o_ref[...] = out.astype(o_ref.dtype)


def post_layernorm(x, w, b, gamma, beta, *, tile_rows=256):
    """x: [batch, seq, dim].  Returns LayerNorm(x @ w + b + x), dtype of x."""
    B, S, D = x.shape
    N = B * S
    x_dtype = x.dtype
    itemsize = jnp.dtype(x_dtype).itemsize
    w_itemsize = jnp.dtype(w.dtype).itemsize

    # Lane-dense feature dim (multiple of 128).
    Dp = max(128, _round_up(D, 128))

    # Sublane packing for the I/O dtype.
    sublane = 8 if itemsize >= 4 else (16 if itemsize == 2 else 32)

    # Row tile: sublane-aligned, no larger than the (rounded-up) row count.
    tile_rows = _round_up(max(sublane, min(tile_rows, _round_up(N, sublane))), sublane)

    # Shrink the row tile until resident weight + double-buffered row tiles
    # + f32 temporaries fit comfortably in VMEM (v7x physical = 64 MiB).
    budget = 48 << 20
    weight_bytes = Dp * Dp * w_itemsize
    while tile_rows > sublane:
        tiles_bytes = 2 * 2 * tile_rows * Dp * itemsize + 2 * tile_rows * Dp * 4
        if weight_bytes + tiles_bytes + 3 * Dp * 4 <= budget:
            break
        tile_rows = _round_up(max(tile_rows // 2, sublane), sublane)

    Np = _round_up(N, tile_rows)

    # Zero-pad rows (remainder tile) and feature dim; skip no-op pads.
    x2d = x.reshape(N, D)
    if Np != N or Dp != D:
        x2d = jnp.pad(x2d, ((0, Np - N), (0, Dp - D)))
    if Dp != D:
        wp = jnp.pad(w, ((0, Dp - D), (0, Dp - D)))
        bp = jnp.pad(b.reshape(1, D), ((0, 0), (0, Dp - D)))
        gp = jnp.pad(gamma.reshape(1, D), ((0, 0), (0, Dp - D)))
        betap = jnp.pad(beta.reshape(1, D), ((0, 0), (0, Dp - D)))
    else:
        wp = w
        bp = b.reshape(1, D)
        gp = gamma.reshape(1, D)
        betap = beta.reshape(1, D)

    kernel = functools.partial(_post_layernorm_kernel, d_true=D)

    # VMEM budget: weight single-buffered + double-buffered row tiles + temps.
    est = (weight_bytes                                # resident weight
           + 3 * Dp * 4                                # bias / gamma / beta
           + 2 * 2 * tile_rows * Dp * itemsize         # x + out, double-buffered
           + 2 * tile_rows * Dp * 4)                   # f32 temporaries headroom
    vmem_limit = int(min(max(2 * est, 32 << 20), 60 << 20))  # stay under v7x 64 MiB

    cost = pl.CostEstimate(
        flops=int(2 * Np * Dp * Dp + 10 * Np * Dp),
        transcendentals=int(Np),
        bytes_accessed=int(2 * Np * Dp * itemsize + weight_bytes + 3 * Dp * 4),
    )

    def _run(single_buffer_consts):
        const_kw = dict(pipeline_mode=pl.Buffered(1)) if single_buffer_consts else {}
        in_specs = [
            pl.BlockSpec((tile_rows, Dp), lambda i: (i, 0)),           # x rows
            pl.BlockSpec((Dp, Dp), lambda i: (0, 0), **const_kw),      # weight
            pl.BlockSpec((1, Dp), lambda i: (0, 0), **const_kw),       # bias
            pl.BlockSpec((1, Dp), lambda i: (0, 0), **const_kw),       # gamma
            pl.BlockSpec((1, Dp), lambda i: (0, 0), **const_kw),       # beta
        ]
        out_specs = pl.BlockSpec((tile_rows, Dp), lambda i: (i, 0))
        return pl.pallas_call(
            kernel,
            out_shape=jax.ShapeDtypeStruct((Np, Dp), x_dtype),
            grid_spec=pltpu.PrefetchScalarGridSpec(
                num_scalar_prefetch=0,
                grid=(Np // tile_rows,),
                in_specs=in_specs,
                out_specs=out_specs,
            ),
            compiler_params=pltpu.CompilerParams(
                dimension_semantics=("parallel",),  # row axis shards across TCs (v7x)
                vmem_limit_bytes=vmem_limit,
            ),
            cost_estimate=cost,
        )(x2d, wp, bp, gp, betap)

    try:
        out2d = _run(single_buffer_consts=True)
    except Exception:
        # Fallback for jax versions that reject pipeline_mode on these inputs.
        out2d = _run(single_buffer_consts=False)

    if Np != N or Dp != D:
        out2d = out2d[:N, :D]
    return out2d.reshape(B, S, D)


def reference(x, w, b, gamma, beta):
    fx = jnp.einsum("bsd,de->bse", x.astype(jnp.float32), w.astype(jnp.float32)) + b
    z = fx + x.astype(jnp.float32)
    mean = jnp.mean(z, axis=-1, keepdims=True)
    var = jnp.mean((z - mean) ** 2, axis=-1, keepdims=True)
    return ((z - mean) * jax.lax.rsqrt(var + EPS)) * gamma + beta


if __name__ == "__main__":
    batch, seq, dim = 2, 8, 32

    key = jax.random.PRNGKey(0)
    kx, kw, kb = jax.random.split(key, 3)

    x = jax.random.normal(kx, (batch, seq, dim), dtype=jnp.float32)

    # func = Linear(dim, dim), torch-default-like init bound 1/sqrt(dim)
    bound = 1.0 / (dim ** 0.5)
    w = jax.random.uniform(kw, (dim, dim), minval=-bound, maxval=bound,
                           dtype=jnp.float32)
    b = jax.random.uniform(kb, (dim,), minval=-bound, maxval=bound,
                           dtype=jnp.float32)

    # nn.LayerNorm default init: gamma = 1, beta = 0
    gamma = jnp.ones((dim,), dtype=jnp.float32)
    beta = jnp.zeros((dim,), dtype=jnp.float32)

    out = post_layernorm(x, w, b, gamma, beta)
    out = jax.block_until_ready(out)

    ref = reference(x, w, b, gamma, beta)
    assert out.shape == (batch, seq, dim)
    assert jnp.allclose(out, ref, atol=1e-5, rtol=1e-5), "mismatch vs reference"

    print("KERNEL_OK")
</pallas_src>

<mosaic_0001>
module attributes {stable_mosaic.version = 11 : i64} {
  func.func @_post_layernorm_kernel(%arg0: i32, %arg1: memref<16x128xf32, #tpu.memory_space<vmem>>, %arg2: memref<128x128xf32, #tpu.memory_space<vmem>>, %arg3: memref<1x128xf32, #tpu.memory_space<vmem>>, %arg4: memref<1x128xf32, #tpu.memory_space<vmem>>, %arg5: memref<1x128xf32, #tpu.memory_space<vmem>>, %arg6: memref<16x128xf32, #tpu.memory_space<vmem>>) attributes {dimension_semantics = [#tpu.dimension_semantics<parallel>], iteration_bounds = array<i64: 1>, scalar_prefetch = 0 : i64, scratch_operands = 0 : i64, tpu.core_type = #tpu.core_type<tc>, window_params = [{transform_indices = @transform_0, window_bounds = array<i64: 16, 128>}, {pipeline_mode = #tpu.pipeline_mode<synchronous>, transform_indices = @transform_1, window_bounds = array<i64: 128, 128>}, {pipeline_mode = #tpu.pipeline_mode<synchronous>, transform_indices = @transform_2, window_bounds = array<i64: 1, 128>}, {pipeline_mode = #tpu.pipeline_mode<synchronous>, transform_indices = @transform_3, window_bounds = array<i64: 1, 128>}, {pipeline_mode = #tpu.pipeline_mode<synchronous>, transform_indices = @transform_4, window_bounds = array<i64: 1, 128>}, {transform_indices = @transform_5, window_bounds = array<i64: 16, 128>}]} {
    %c0 = arith.constant 0 : index
    %c0_0 = arith.constant 0 : index
    %0 = vector.load %arg1[%c0, %c0_0] : memref<16x128xf32, #tpu.memory_space<vmem>>, vector<16x128xf32>
    %c0_1 = arith.constant 0 : index
    %c0_2 = arith.constant 0 : index
    %1 = vector.load %arg2[%c0_1, %c0_2] : memref<128x128xf32, #tpu.memory_space<vmem>>, vector<128x128xf32>
    %cst = arith.constant dense<0.000000e+00> : vector<16x128xf32>
    %2 = tpu.matmul %0, %1, %cst {dimension_numbers = #tpu.dot_dimension_numbers<[1], [0], [0], [1], [0, 0, 1, 1], [], []>} : vector<16x128xf32>, vector<128x128xf32>, vector<16x128xf32> -> vector<16x128xf32>
    %c0_3 = arith.constant 0 : index
    %c0_4 = arith.constant 0 : index
    %3 = vector.load %arg3[%c0_3, %c0_4] : memref<1x128xf32, #tpu.memory_space<vmem>>, vector<1x128xf32>
    %4 = vector.broadcast %3 : vector<1x128xf32> to vector<16x128xf32>
    %5 = arith.addf %2, %4 : vector<16x128xf32>
    %6 = arith.addf %5, %0 : vector<16x128xf32>
    %cst_5 = arith.constant dense<0.000000e+00> : vector<16xf32>
    %7 = vector.multi_reduction <add>, %6, %cst_5 [1] : vector<16x128xf32> to vector<16xf32>
    %8 = vector.shape_cast %7 : vector<16xf32> to vector<16x1xf32>
    %cst_6 = arith.constant 3.125000e-02 : f32
    %9 = vector.broadcast %cst_6 : f32 to vector<16x1xf32>
    %10 = arith.mulf %8, %9 : vector<16x1xf32>
    %11 = vector.broadcast %10 : vector<16x1xf32> to vector<16x128xf32>
    %12 = arith.subf %6, %11 : vector<16x128xf32>
    %13 = tpu.iota {dimensions = array<i32: 1>} : vector<1x128xi32>
    %c32_i32 = arith.constant 32 : i32
    %14 = vector.broadcast %c32_i32 : i32 to vector<1x128xi32>
    %15 = arith.cmpi slt, %13, %14 : vector<1x128xi32>
    %cst_7 = arith.constant 0.000000e+00 : f32
    %16 = vector.shape_cast %15 : vector<1x128xi1> to vector<1x128xi1>
    %17 = vector.broadcast %16 : vector<1x128xi1> to vector<16x128xi1>
    %18 = vector.broadcast %cst_7 : f32 to vector<16x128xf32>
    %19 = arith.select %17, %12, %18 : vector<16x128xi1>, vector<16x128xf32>
    %20 = arith.mulf %19, %19 : vector<16x128xf32>
    %cst_8 = arith.constant dense<0.000000e+00> : vector<16xf32>
    %21 = vector.multi_reduction <add>, %20, %cst_8 [1] : vector<16x128xf32> to vector<16xf32>
    %22 = vector.shape_cast %21 : vector<16xf32> to vector<16x1xf32>
    %cst_9 = arith.constant 3.125000e-02 : f32
    %23 = vector.broadcast %cst_9 : f32 to vector<16x1xf32>
    %24 = arith.mulf %22, %23 : vector<16x1xf32>
    %cst_10 = arith.constant 9.99999974E-6 : f32
    %25 = vector.broadcast %cst_10 : f32 to vector<16x1xf32>
    %26 = arith.addf %24, %25 : vector<16x1xf32>
    %27 = math.rsqrt %26 : vector<16x1xf32>
    %28 = vector.broadcast %27 : vector<16x1xf32> to vector<16x128xf32>
    %29 = arith.mulf %12, %28 : vector<16x128xf32>
    %c0_11 = arith.constant 0 : index
    %c0_12 = arith.constant 0 : index
    %30 = vector.load %arg4[%c0_11, %c0_12] : memref<1x128xf32, #tpu.memory_space<vmem>>, vector<1x128xf32>
    %31 = vector.broadcast %30 : vector<1x128xf32> to vector<16x128xf32>
    %32 = arith.mulf %29, %31 : vector<16x128xf32>
    %c0_13 = arith.constant 0 : index
    %c0_14 = arith.constant 0 : index
    %33 = vector.load %arg5[%c0_13, %c0_14] : memref<1x128xf32, #tpu.memory_space<vmem>>, vector<1x128xf32>
    %34 = vector.broadcast %33 : vector<1x128xf32> to vector<16x128xf32>
    %35 = arith.addf %32, %34 : vector<16x128xf32>
    %c0_15 = arith.constant 0 : index
    %c0_16 = arith.constant 0 : index
    %36 = vector.load %arg6[%c0_15, %c0_16] : memref<16x128xf32, #tpu.memory_space<vmem>>, vector<16x128xf32>
    tpu.vector_store %arg6[%c0_15, %c0_16], %35 {strides = array<i32>} : memref<16x128xf32, #tpu.memory_space<vmem>>, vector<16x128xf32>,
    return
  }
  func.func @transform_0(%arg0: i32) -> (i32, i32) {
    %c0_i32 = arith.constant 0 : i32
    %c0_i32_0 = arith.constant 0 : i32
    return %arg0, %c0_i32 : i32, i32
  }
  func.func @transform_1(%arg0: i32) -> (i32, i32) {
    %c0_i32 = arith.constant 0 : i32
    %c0_i32_0 = arith.constant 0 : i32
    %c0_i32_1 = arith.constant 0 : i32
    return %c0_i32, %c0_i32_0 : i32, i32
  }
  func.func @transform_2(%arg0: i32) -> (i32, i32) {
    %c0_i32 = arith.constant 0 : i32
    %c0_i32_0 = arith.constant 0 : i32
    %c0_i32_1 = arith.constant 0 : i32
    return %c0_i32, %c0_i32_0 : i32, i32
  }
  func.func @transform_3(%arg0: i32) -> (i32, i32) {
    %c0_i32 = arith.constant 0 : i32
    %c0_i32_0 = arith.constant 0 : i32
    %c0_i32_1 = arith.constant 0 : i32
    return %c0_i32, %c0_i32_0 : i32, i32
  }
  func.func @transform_4(%arg0: i32) -> (i32, i32) {
    %c0_i32 = arith.constant 0 : i32
    %c0_i32_0 = arith.constant 0 : i32
    %c0_i32_1 = arith.constant 0 : i32
    return %c0_i32, %c0_i32_0 : i32, i32
  }
  func.func @transform_5(%arg0: i32) -> (i32, i32) {
    %c0_i32 = arith.constant 0 : i32
    %c0_i32_0 = arith.constant 0 : i32
    return %arg0, %c0_i32 : i32, i32
  }
}

module attributes {stable_mosaic.version = 11 : i64} {
  func.func @_post_layernorm_kernel(%arg0: i32, %arg1: memref<16x128xf32, #tpu.memory_space<vmem>>, %arg2: memref<128x128xf32, #tpu.memory_space<vmem>>, %arg3: memref<1x128xf32, #tpu.memory_space<vmem>>, %arg4: memref<1x128xf32, #tpu.memory_space<vmem>>, %arg5: memref<1x128xf32, #tpu.memory_space<vmem>>, %arg6: memref<16x128xf32, #tpu.memory_space<vmem>>) attributes {dimension_semantics = [#tpu.dimension_semantics<parallel>], iteration_bounds = array<i64: 1>, scalar_prefetch = 0 : i64, scratch_operands = 0 : i64, tpu.core_type = #tpu.core_type<tc>, window_params = [{transform_indices = @transform_0, window_bounds = array<i64: 16, 128>}, {pipeline_mode = #tpu.pipeline_mode<synchronous>, transform_indices = @transform_1, window_bounds = array<i64: 128, 128>}, {pipeline_mode = #tpu.pipeline_mode<synchronous>, transform_indices = @transform_2, window_bounds = array<i64: 1, 128>}, {pipeline_mode = #tpu.pipeline_mode<synchronous>, transform_indices = @transform_3, window_bounds = array<i64: 1, 128>}, {pipeline_mode = #tpu.pipeline_mode<synchronous>, transform_indices = @transform_4, window_bounds = array<i64: 1, 128>}, {transform_indices = @transform_5, window_bounds = array<i64: 16, 128>}]} {
    %c0 = arith.constant 0 : index
    %c0_0 = arith.constant 0 : index
    %0 = vector.load %arg1[%c0, %c0_0] : memref<16x128xf32, #tpu.memory_space<vmem>>, vector<16x128xf32>
    %c0_1 = arith.constant 0 : index
    %c0_2 = arith.constant 0 : index
    %1 = vector.load %arg2[%c0_1, %c0_2] : memref<128x128xf32, #tpu.memory_space<vmem>>, vector<128x128xf32>
    %cst = arith.constant dense<0.000000e+00> : vector<16x128xf32>
    %2 = tpu.matmul %0, %1, %cst {dimension_numbers = #tpu.dot_dimension_numbers<[1], [0], [0], [1], [0, 0, 1, 1], [], []>} : vector<16x128xf32>, vector<128x128xf32>, vector<16x128xf32> -> vector<16x128xf32>
    %c0_3 = arith.constant 0 : index
    %c0_4 = arith.constant 0 : index
    %3 = vector.load %arg3[%c0_3, %c0_4] : memref<1x128xf32, #tpu.memory_space<vmem>>, vector<1x128xf32>
    %4 = vector.broadcast %3 : vector<1x128xf32> to vector<16x128xf32>
    %5 = arith.addf %2, %4 : vector<16x128xf32>
    %6 = arith.addf %5, %0 : vector<16x128xf32>
    %cst_5 = arith.constant dense<0.000000e+00> : vector<16xf32>
    %7 = vector.multi_reduction <add>, %6, %cst_5 [1] : vector<16x128xf32> to vector<16xf32>
    %8 = vector.shape_cast %7 : vector<16xf32> to vector<16x1xf32>
    %cst_6 = arith.constant 3.125000e-02 : f32
    %9 = vector.broadcast %cst_6 : f32 to vector<16x1xf32>
    %10 = arith.mulf %8, %9 : vector<16x1xf32>
    %11 = vector.broadcast %10 : vector<16x1xf32> to vector<16x128xf32>
    %12 = arith.subf %6, %11 : vector<16x128xf32>
    %13 = tpu.iota {dimensions = array<i32: 1>} : vector<1x128xi32>
    %c32_i32 = arith.constant 32 : i32
    %14 = vector.broadcast %c32_i32 : i32 to vector<1x128xi32>
    %15 = arith.cmpi slt, %13, %14 : vector<1x128xi32>
    %cst_7 = arith.constant 0.000000e+00 : f32
    %16 = vector.shape_cast %15 : vector<1x128xi1> to vector<1x128xi1>
    %17 = vector.broadcast %16 : vector<1x128xi1> to vector<16x128xi1>
    %18 = vector.broadcast %cst_7 : f32 to vector<16x128xf32>
    %19 = arith.select %17, %12, %18 : vector<16x128xi1>, vector<16x128xf32>
    %20 = arith.mulf %19, %19 : vector<16x128xf32>
    %cst_8 = arith.constant dense<0.000000e+00> : vector<16xf32>
    %21 = vector.multi_reduction <add>, %20, %cst_8 [1] : vector<16x128xf32> to vector<16xf32>
    %22 = vector.shape_cast %21 : vector<16xf32> to vector<16x1xf32>
    %cst_9 = arith.constant 3.125000e-02 : f32
    %23 = vector.broadcast %cst_9 : f32 to vector<16x1xf32>
    %24 = arith.mulf %22, %23 : vector<16x1xf32>
    %cst_10 = arith.constant 9.99999974E-6 : f32
    %25 = vector.broadcast %cst_10 : f32 to vector<16x1xf32>
    %26 = arith.addf %24, %25 : vector<16x1xf32>
    %27 = math.rsqrt %26 : vector<16x1xf32>
    %28 = vector.broadcast %27 : vector<16x1xf32> to vector<16x128xf32>
    %29 = arith.mulf %12, %28 : vector<16x128xf32>
    %c0_11 = arith.constant 0 : index
    %c0_12 = arith.constant 0 : index
    %30 = vector.load %arg4[%c0_11, %c0_12] : memref<1x128xf32, #tpu.memory_space<vmem>>, vector<1x128xf32>
    %31 = vector.broadcast %30 : vector<1x128xf32> to vector<16x128xf32>
    %32 = arith.mulf %29, %31 : vector<16x128xf32>
    %c0_13 = arith.constant 0 : index
    %c0_14 = arith.constant 0 : index
    %33 = vector.load %arg5[%c0_13, %c0_14] : memref<1x128xf32, #tpu.memory_space<vmem>>, vector<1x128xf32>
    %34 = vector.broadcast %33 : vector<1x128xf32> to vector<16x128xf32>
    %35 = arith.addf %32, %34 : vector<16x128xf32>
    %c0_15 = arith.constant 0 : index
    %c0_16 = arith.constant 0 : index
    %36 = vector.load %arg6[%c0_15, %c0_16] : memref<16x128xf32, #tpu.memory_space<vmem>>, vector<16x128xf32>
    tpu.vector_store %arg6[%c0_15, %c0_16], %35 {strides = array<i32>} : memref<16x128xf32, #tpu.memory_space<vmem>>, vector<16x128xf32>,
    return
  }
  func.func @transform_0(%arg0: i32) -> (i32, i32) {
    %c0_i32 = arith.constant 0 : i32
    %c0_i32_0 = arith.constant 0 : i32
    return %arg0, %c0_i32 : i32, i32
  }
  func.func @transform_1(%arg0: i32) -> (i32, i32) {
    %c0_i32 = arith.constant 0 : i32
    %c0_i32_0 = arith.constant 0 : i32
    %c0_i32_1 = arith.constant 0 : i32
    return %c0_i32, %c0_i32_0 : i32, i32
  }
  func.func @transform_2(%arg0: i32) -> (i32, i32) {
    %c0_i32 = arith.constant 0 : i32
    %c0_i32_0 = arith.constant 0 : i32
    %c0_i32_1 = arith.constant 0 : i32
    return %c0_i32, %c0_i32_0 : i32, i32
  }
  func.func @transform_3(%arg0: i32) -> (i32, i32) {
    %c0_i32 = arith.constant 0 : i32
    %c0_i32_0 = arith.constant 0 : i32
    %c0_i32_1 = arith.constant 0 : i32
    return %c0_i32, %c0_i32_0 : i32, i32
  }
  func.func @transform_4(%arg0: i32) -> (i32, i32) {
    %c0_i32 = arith.constant 0 : i32
    %c0_i32_0 = arith.constant 0 : i32
    %c0_i32_1 = arith.constant 0 : i32
    return %c0_i32, %c0_i32_0 : i32, i32
  }
  func.func @transform_5(%arg0: i32) -> (i32, i32) {
    %c0_i32 = arith.constant 0 : i32
    %c0_i32_0 = arith.constant 0 : i32
    return %arg0, %c0_i32 : i32, i32
  }
}

</mosaic_0001>

<llo_original>
// kernel: tpu_custom_call.1
$region0: #{tpu_custom_call.1}
  #allocation0 [shape = 'u32[]', space=smem, size = 0x4, offset = 0x4, fixed_abs, tag = 'smem constant byte address 0x4 - core index']
  #allocation1 [shape = 'u32[144,128]{1,0:T(1,128)}', space=vmem, size = 0x12000, scoped, tag = 'internal scratch']
  %s0 = inlined_call_operand.hbm [shape: f32[16,128], index: 0, kind: input, shape index: {}]
  %s1 = inlined_call_operand.hbm [shape: f32[128,128], index: 1, kind: input, shape index: {}]
  %s2 = inlined_call_operand.vmem [shape: f32[1,128], index: 2, kind: input, shape index: {}]
  %s3 = inlined_call_operand.vmem [shape: f32[1,128], index: 3, kind: input, shape index: {}]
  %s4 = inlined_call_operand.vmem [shape: f32[1,128], index: 4, kind: input, shape index: {}]
  %s5 = inlined_call_operand.hbm [shape: f32[16,128], index: 5, kind: output, shape index: {}]
  %s6 = sld [smem:[#allocation0]]
  $region38: #{tpu_custom_call.1} parent=0
    _
  %s8 = ssub.s32 1, %s6
  %s9 = scalar_select 0, %s8, %s6
  $region1: #{tpu_custom_call.1} parent=0
    #allocation2 [shape = 'u8[8192]{0}', space=vmem, size = 0x2000, scoped, tag = 'input window, operand 0, single buffered']
    #allocation3 [shape = 's32[1]{0}', space=sflag, size = 0x4, scoped, tag = 'scoped memory for tpu_custom_call.1']
    #allocation4 [shape = 's32[1]{0}', space=sflag, size = 0x4, scoped, tag = 'scoped memory for tpu_custom_call.1']
    #allocation5 [shape = 'u8[65536]{0}', space=vmem, size = 0x10000, scoped, tag = 'input window, operand 1, single buffered']
    #allocation6 [shape = 's32[1]{0}', space=sflag, size = 0x4, scoped, tag = 'scoped memory for tpu_custom_call.1']
    #allocation7 [shape = 'u8[8192]{0}', space=vmem, size = 0x2000, scoped, tag = 'output window, operand 0, single buffered']
    %10 = vsyncpa [#allocation3], 0
    %11 = vsyncpa [#allocation6], 0
    %12 = vsyncpa [#allocation4], 0
    // Predicated region
    $region2: #{tpu_custom_call.1} parent=1 // pred_check
      _
    $region3: #{tpu_custom_call.1} parent=1 // pred_check_branch
      %14 = sbr.rel (0) target = $region5
    $region4: #{tpu_custom_call.1} parent=1 // pred_region
      %s16 = ssub.s32 256, 256
      %17 = vsyncadd [#allocation3], %s16
      %s18 = sshll.u32 [#allocation2], 4
      %s19 = int_to_ptr.vmem [resolvable:$true] %s18
      %24 = dma.hbm_to_vmem [thread:$0]  %s0, 256, %s19, [#allocation3], 128, 128, 8
    $region5: #{tpu_custom_call.1} parent=1 // pred_fallthru
      _
    // Predicated region
    $region6: #{tpu_custom_call.1} parent=1 // pred_check
      _
    $region7: #{tpu_custom_call.1} parent=1 // pred_check_branch
      %26 = sbr.rel (0) target = $region9
    $region8: #{tpu_custom_call.1} parent=1 // pred_region
      %s28 = ssub.s32 2048, 2048
      %29 = vsyncadd [#allocation6], %s28
      %s30 = sshll.u32 [#allocation5], 4
      %s31 = int_to_ptr.vmem [resolvable:$true] %s30
      %36 = dma.hbm_to_vmem [thread:$0]  %s1, 2048, %s31, [#allocation6], 128, 128, 8
    $region9: #{tpu_custom_call.1} parent=1 // pred_fallthru
      _
    // Predicated region
    $region10: #{tpu_custom_call.1} parent=1 // pred_check
      _
    $region11: #{tpu_custom_call.1} parent=1 // pred_check_branch
      %38 = sbr.rel (0) target = $region13
    $region12: #{tpu_custom_call.1} parent=1 // pred_region
      _
    $region13: #{tpu_custom_call.1} parent=1 // pred_fallthru
      _
    // Predicated region
    $region14: #{tpu_custom_call.1} parent=1 // pred_check
      _
    $region15: #{tpu_custom_call.1} parent=1 // pred_check_branch
      %40 = sbr.rel (0) target = $region17
    $region16: #{tpu_custom_call.1} parent=1 // pred_region
      _
    $region17: #{tpu_custom_call.1} parent=1 // pred_fallthru
      _
    // Predicated region
    $region18: #{tpu_custom_call.1} parent=1 // pred_check
      _
    $region19: #{tpu_custom_call.1} parent=1 // pred_check_branch
      %42 = sbr.rel (0) target = $region21
    $region20: #{tpu_custom_call.1} parent=1 // pred_region
      _
    $region21: #{tpu_custom_call.1} parent=1 // pred_fallthru
      _
    // Predicated region
    $region22: #{tpu_custom_call.1} parent=1 // pred_check
      _
    $region23: #{tpu_custom_call.1} parent=1 // pred_check_branch
      %44 = sbr.rel (0) target = $region25
    $region24: #{tpu_custom_call.1} parent=1 // pred_region
      %45 = dma.done [#allocation3], 256
    $region25: #{tpu_custom_call.1} parent=1 // pred_fallthru
      _
    // Predicated region
    $region26: #{tpu_custom_call.1} parent=1 // pred_check
      _
    $region27: #{tpu_custom_call.1} parent=1 // pred_check_branch
      %47 = sbr.rel (0) target = $region29
    $region28: #{tpu_custom_call.1} parent=1 // pred_region
      %48 = dma.done [#allocation6], 2048
    $region29: #{tpu_custom_call.1} parent=1 // pred_fallthru
      _
    %v49 = vld [vmem:[#allocation2] sm:$0xff]
    %v50 = vld [vmem:[#allocation2 + $0x8] sm:$0xff]
    %v51 = vld [vmem:[#allocation5] sm:$0xff]
    %v52 = vld [vmem:[#allocation5 + $0x8] sm:$0xff]
    %v53 = vld [vmem:[#allocation5 + $0x10] sm:$0xff]
    %v54 = vld [vmem:[#allocation5 + $0x18] sm:$0xff]
    %v55 = vld [vmem:[#allocation5 + $0x20] sm:$0xff]
    %v56 = vld [vmem:[#allocation5 + $0x28] sm:$0xff]
    %v57 = vld [vmem:[#allocation5 + $0x30] sm:$0xff]
    %v58 = vld [vmem:[#allocation5 + $0x38] sm:$0xff]
    %v59 = vld [vmem:[#allocation5 + $0x40] sm:$0xff]
    %v60 = vld [vmem:[#allocation5 + $0x48] sm:$0xff]
    %v61 = vld [vmem:[#allocation5 + $0x50] sm:$0xff]
    %v62 = vld [vmem:[#allocation5 + $0x58] sm:$0xff]
    %v63 = vld [vmem:[#allocation5 + $0x60] sm:$0xff]
    %v64 = vld [vmem:[#allocation5 + $0x68] sm:$0xff]
    %v65 = vld [vmem:[#allocation5 + $0x70] sm:$0xff]
    %v66 = vld [vmem:[#allocation5 + $0x78] sm:$0xff]
    %v67 = vld [vmem:[%s2] sm:$0x1]
    %v69 = vlaneseq
    %v70 = vshrl.u32 %v69, 7
    %v71 = vsub.s32 0, %v70
    %v72 = vrot.slane %v67, %v71
    %74 = vmatprep.subr.mxu0 0.0
    %75 = vmatpush1.msra.mxu0 %v51
    %76 = vmatprep.subr.mxu0 0.0
    %77 = vmatpush1.msra.mxu0 %v52
    %78 = vmatprep.subr.mxu0 0.0
    %79 = vmatpush1.msra.mxu0 %v53
    %80 = vmatprep.subr.mxu0 0.0
    %81 = vmatpush1.msra.mxu0 %v54
    %82 = vmatprep.subr.mxu0 0.0
    %83 = vmatpush1.msra.mxu0 %v55
    %84 = vmatprep.subr.mxu0 0.0
    %85 = vmatpush1.msra.mxu0 %v56
    %86 = vmatprep.subr.mxu0 0.0
    %87 = vmatpush1.msra.mxu0 %v57
    %88 = vmatprep.subr.mxu0 0.0
    %89 = vmatpush1.msra.mxu0 %v58
    %90 = vmatprep.subr.mxu0 0.0
    %91 = vmatpush1.msra.mxu0 %v59
    %92 = vmatprep.subr.mxu0 0.0
    %93 = vmatpush1.msra.mxu0 %v60
    %94 = vmatprep.subr.mxu0 0.0
    %95 = vmatpush1.msra.mxu0 %v61
    %96 = vmatprep.subr.mxu0 0.0
    %97 = vmatpush1.msra.mxu0 %v62
    %98 = vmatprep.subr.mxu0 0.0
    %99 = vmatpush1.msra.mxu0 %v63
    %100 = vmatprep.subr.mxu0 0.0
    %101 = vmatpush1.msra.mxu0 %v64
    %102 = vmatprep.subr.mxu0 0.0
    %103 = vmatpush1.msra.mxu0 %v65
    %104 = vmatprep.subr.mxu0 0.0
    %105 = vmatpush1.msra.mxu0 %v66
    %106 = vmatprep.subr.mxu0 0.0
    %107 = vmatpush1.msra.mxu0 0.0
    %108 = vmatprep.subr.mxu0 0.0
    %109 = vmatpush1.msra.mxu0 0.0
    %110 = vmatprep.subr.mxu0 0.0
    %111 = vmatpush1.msra.mxu0 0.0
    %112 = vmatprep.subr.mxu0 0.0
    %113 = vmatpush1.msra.mxu0 0.0
    %114 = vmatprep.subr.mxu0 0.0
    %115 = vmatpush1.msra.mxu0 0.0
    %116 = vmatprep.subr.mxu0 0.0
    %117 = vmatpush1.msra.mxu0 0.0
    %118 = vmatprep.subr.mxu0 0.0
    %119 = vmatpush1.msra.mxu0 0.0
    %120 = vmatprep.subr.mxu0 0.0
    %121 = vmatpush1.msra.mxu0 0.0
    %122 = vmatprep.subr.mxu0 0.0
    %123 = vmatpush1.msra.mxu0 0.0
    %124 = vmatprep.subr.mxu0 0.0
    %125 = vmatpush1.msra.mxu0 0.0
    %126 = vmatprep.subr.mxu0 0.0
    %127 = vmatpush1.msra.mxu0 0.0
    %128 = vmatprep.subr.mxu0 0.0
    %129 = vmatpush1.msra.mxu0 0.0
    %130 = vmatprep.subr.mxu0 0.0
    %131 = vmatpush1.msra.mxu0 0.0
    %132 = vmatprep.subr.mxu0 0.0
    %133 = vmatpush1.msra.mxu0 0.0
    %134 = vmatprep.subr.mxu0 0.0
    %135 = vmatpush1.msra.mxu0 0.0
    %136 = vmatprep.subr.mxu0 0.0
    %137 = vmatpush1.msra.mxu0 0.0
    %138 = vmatprep.mubr.f32.mxu0 0.0
    %139 = vmatmul.mubr.f32.gmra.mrb[0].mxu0 %v49
    %v140 = vpop.f32.mrb[0].mxu0
    %v141 = vadd.f32 %v72, %v140
    %v142 = vpop.f32.mrb[0].mxu0
    %143 = vmatprep.mubr.f32.mxu0 0.0
    %144 = vmatmul.mubr.f32.gmra.mrb[0].mxu0 %v50
    %v145 = vpop.f32.mrb[0].mxu0
    %v146 = vadd.f32 %v72, %v145
    %v147 = vpop.f32.mrb[0].mxu0
    %148 = vdwg.mxu0
    %v149 = vadd.f32 %v141, %v49
    %v150 = vadd.f32 %v146, %v50
    %151 = vadd.xlane.f32.xlu0 %v149
    %v152 = vpop.xlane.xlu0 %151
    %153 = vadd.xlane.f32.xlu0 %v150
    %v154 = vpop.xlane.xlu0 %153
    %v155 = vmul.f32 %v152, 0.03125
    %v156 = vmul.f32 %v154, 0.03125
    %v157 = vsub.f32 %v149, %v155
    %v158 = vsub.f32 %v150, %v156
    %v159 = vlaneseq
    %v160 = vand.u32 %v159, 127
    %vm161 = vcmp.lt.s32.totalorder %v160, 32
    %v162 = vsel %vm161, 1, 0
    %vm163 = vcmp.eq.s32.totalorder %v162, 1
    %v164 = vsel %vm163, %v157, 0.0
    %v165 = vsel %vm163, %v158, 0.0
    %v166 = vmul.f32 %v164, %v164
    %v167 = vmul.f32 %v165, %v165
    %168 = vadd.xlane.f32.xlu0 %v166
    %v169 = vpop.xlane.xlu0 %168
    %170 = vadd.xlane.f32.xlu0 %v167
    %v171 = vpop.xlane.xlu0 %170
    %v172 = vmul.f32 %v169, 0.03125
    %v173 = vmul.f32 %v171, 0.03125
    %v174 = vadd.f32 %v172, 1e-05
    %v175 = vadd.f32 %v173, 1e-05
    %v176 = vrsqrt.pop %v174
    %v177 = vrsqrt.pop %v175
    %v178 = vmul.f32 %v157, %v176
    %v179 = vmul.f32 %v158, %v177
    %v180 = vld [vmem:[%s3] sm:$0x1]
    %v182 = vlaneseq
    %v183 = vshrl.u32 %v182, 7
    %v184 = vsub.s32 0, %v183
    %v185 = vrot.slane %v180, %v184
    %v187 = vmul.f32 %v178, %v185
    %v188 = vmul.f32 %v179, %v185
    %v189 = vld [vmem:[%s4] sm:$0x1]
    %v191 = vlaneseq
    %v192 = vshrl.u32 %v191, 7
    %v193 = vsub.s32 0, %v192
    %v194 = vrot.slane %v189, %v193
    %v196 = vadd.f32 %v187, %v194
    %v197 = vadd.f32 %v188, %v194
    %198 = vst [vmem:[#allocation7] sm:$0xff] %v196
    %199 = vst [vmem:[#allocation7 + $0x8] sm:$0xff] %v197
    // Predicated region
    $region30: #{tpu_custom_call.1} parent=1 // pred_check
      _
    $region31: #{tpu_custom_call.1} parent=1 // pred_check_branch
      %201 = sbr.rel (0) target = $region33
    $region32: #{tpu_custom_call.1} parent=1 // pred_region
      %s203 = ssub.s32 256, 256
      %204 = vsyncadd [#allocation4], %s203
      %s205 = sshll.u32 [#allocation7], 4
      %s206 = int_to_ptr.vmem [resolvable:$true] %s205
      %211 = dma.vmem_to_hbm [thread:$0]  %s206, 256, %s5, [#allocation4], 128, 128, 8
    $region33: #{tpu_custom_call.1} parent=1 // pred_fallthru
      _
    // Predicated region
    $region34: #{tpu_custom_call.1} parent=1 // pred_check
      _
    $region35: #{tpu_custom_call.1} parent=1 // pred_check_branch
      %213 = sbr.rel (0) target = $region37
    $region36: #{tpu_custom_call.1} parent=1 // pred_region
      %214 = dma.done [#allocation4], 256
    $region37: #{tpu_custom_call.1} parent=1 // pred_fallthru
      _
    %215 = vsyncpa [#allocation3], 1
    %216 = vsyncpa [#allocation6], 1
    %217 = vsyncpa [#allocation4], 1

// kernel: tpu_custom_call.1
$region0: #{tpu_custom_call.1}
  #allocation0 [shape = 'u32[]', space=smem, size = 0x4, offset = 0x4, fixed_abs, tag = 'smem constant byte address 0x4 - core index']
  #allocation1 [shape = 'u32[144,128]{1,0:T(1,128)}', space=vmem, size = 0x12000, scoped, tag = 'internal scratch']
  %s0 = inlined_call_operand.hbm [shape: f32[16,128], index: 0, kind: input, shape index: {}]
  %s1 = inlined_call_operand.hbm [shape: f32[128,128], index: 1, kind: input, shape index: {}]
  %s2 = inlined_call_operand.vmem [shape: f32[1,128], index: 2, kind: input, shape index: {}]
  %s3 = inlined_call_operand.vmem [shape: f32[1,128], index: 3, kind: input, shape index: {}]
  %s4 = inlined_call_operand.vmem [shape: f32[1,128], index: 4, kind: input, shape index: {}]
  %s5 = inlined_call_operand.hbm [shape: f32[16,128], index: 5, kind: output, shape index: {}]
  %s6 = sld [smem:[#allocation0]]
  $region38: #{tpu_custom_call.1} parent=0
    _
  %s8 = ssub.s32 1, %s6
  %s9 = scalar_select 0, %s8, %s6
  $region1: #{tpu_custom_call.1} parent=0
    #allocation2 [shape = 'u8[8192]{0}', space=vmem, size = 0x2000, scoped, tag = 'input window, operand 0, single buffered']
    #allocation3 [shape = 's32[1]{0}', space=sflag, size = 0x4, scoped, tag = 'scoped memory for tpu_custom_call.1']
    #allocation4 [shape = 's32[1]{0}', space=sflag, size = 0x4, scoped, tag = 'scoped memory for tpu_custom_call.1']
    #allocation5 [shape = 'u8[65536]{0}', space=vmem, size = 0x10000, scoped, tag = 'input window, operand 1, single buffered']
    #allocation6 [shape = 's32[1]{0}', space=sflag, size = 0x4, scoped, tag = 'scoped memory for tpu_custom_call.1']
    #allocation7 [shape = 'u8[8192]{0}', space=vmem, size = 0x2000, scoped, tag = 'output window, operand 0, single buffered']
    %10 = vsyncpa [#allocation3], 0
    %11 = vsyncpa [#allocation6], 0
    %12 = vsyncpa [#allocation4], 0
    // Predicated region
    $region2: #{tpu_custom_call.1} parent=1 // pred_check
      _
    $region3: #{tpu_custom_call.1} parent=1 // pred_check_branch
      %14 = sbr.rel (0) target = $region5
    $region4: #{tpu_custom_call.1} parent=1 // pred_region
      %s16 = ssub.s32 256, 256
      %17 = vsyncadd [#allocation3], %s16
      %s18 = sshll.u32 [#allocation2], 4
      %s19 = int_to_ptr.vmem [resolvable:$true] %s18
      %24 = dma.hbm_to_vmem [thread:$0]  %s0, 256, %s19, [#allocation3], 128, 128, 8
    $region5: #{tpu_custom_call.1} parent=1 // pred_fallthru
      _
    // Predicated region
    $region6: #{tpu_custom_call.1} parent=1 // pred_check
      _
    $region7: #{tpu_custom_call.1} parent=1 // pred_check_branch
      %26 = sbr.rel (0) target = $region9
    $region8: #{tpu_custom_call.1} parent=1 // pred_region
      %s28 = ssub.s32 2048, 2048
      %29 = vsyncadd [#allocation6], %s28
      %s30 = sshll.u32 [#allocation5], 4
      %s31 = int_to_ptr.vmem [resolvable:$true] %s30
      %36 = dma.hbm_to_vmem [thread:$0]  %s1, 2048, %s31, [#allocation6], 128, 128, 8
    $region9: #{tpu_custom_call.1} parent=1 // pred_fallthru
      _
    // Predicated region
    $region10: #{tpu_custom_call.1} parent=1 // pred_check
      _
    $region11: #{tpu_custom_call.1} parent=1 // pred_check_branch
      %38 = sbr.rel (0) target = $region13
    $region12: #{tpu_custom_call.1} parent=1 // pred_region
      _
    $region13: #{tpu_custom_call.1} parent=1 // pred_fallthru
      _
    // Predicated region
    $region14: #{tpu_custom_call.1} parent=1 // pred_check
      _
    $region15: #{tpu_custom_call.1} parent=1 // pred_check_branch
      %40 = sbr.rel (0) target = $region17
    $region16: #{tpu_custom_call.1} parent=1 // pred_region
      _
    $region17: #{tpu_custom_call.1} parent=1 // pred_fallthru
      _
    // Predicated region
    $region18: #{tpu_custom_call.1} parent=1 // pred_check
      _
    $region19: #{tpu_custom_call.1} parent=1 // pred_check_branch
      %42 = sbr.rel (0) target = $region21
    $region20: #{tpu_custom_call.1} parent=1 // pred_region
      _
    $region21: #{tpu_custom_call.1} parent=1 // pred_fallthru
      _
    // Predicated region
    $region22: #{tpu_custom_call.1} parent=1 // pred_check
      _
    $region23: #{tpu_custom_call.1} parent=1 // pred_check_branch
      %44 = sbr.rel (0) target = $region25
    $region24: #{tpu_custom_call.1} parent=1 // pred_region
      %45 = dma.done [#allocation3], 256
    $region25: #{tpu_custom_call.1} parent=1 // pred_fallthru
      _
    // Predicated region
    $region26: #{tpu_custom_call.1} parent=1 // pred_check
      _
    $region27: #{tpu_custom_call.1} parent=1 // pred_check_branch
      %47 = sbr.rel (0) target = $region29
    $region28: #{tpu_custom_call.1} parent=1 // pred_region
      %48 = dma.done [#allocation6], 2048
    $region29: #{tpu_custom_call.1} parent=1 // pred_fallthru
      _
    %v49 = vld [vmem:[#allocation2] sm:$0xff]
    %v50 = vld [vmem:[#allocation2 + $0x8] sm:$0xff]
    %v51 = vld [vmem:[#allocation5] sm:$0xff]
    %v52 = vld [vmem:[#allocation5 + $0x8] sm:$0xff]
    %v53 = vld [vmem:[#allocation5 + $0x10] sm:$0xff]
    %v54 = vld [vmem:[#allocation5 + $0x18] sm:$0xff]
    %v55 = vld [vmem:[#allocation5 + $0x20] sm:$0xff]
    %v56 = vld [vmem:[#allocation5 + $0x28] sm:$0xff]
    %v57 = vld [vmem:[#allocation5 + $0x30] sm:$0xff]
    %v58 = vld [vmem:[#allocation5 + $0x38] sm:$0xff]
    %v59 = vld [vmem:[#allocation5 + $0x40] sm:$0xff]
    %v60 = vld [vmem:[#allocation5 + $0x48] sm:$0xff]
    %v61 = vld [vmem:[#allocation5 + $0x50] sm:$0xff]
    %v62 = vld [vmem:[#allocation5 + $0x58] sm:$0xff]
    %v63 = vld [vmem:[#allocation5 + $0x60] sm:$0xff]
    %v64 = vld [vmem:[#allocation5 + $0x68] sm:$0xff]
    %v65 = vld [vmem:[#allocation5 + $0x70] sm:$0xff]
    %v66 = vld [vmem:[#allocation5 + $0x78] sm:$0xff]
    %v67 = vld [vmem:[%s2] sm:$0x1]
    %v69 = vlaneseq
    %v70 = vshrl.u32 %v69, 7
    %v71 = vsub.s32 0, %v70
    %v72 = vrot.slane %v67, %v71
    %74 = vmatprep.subr.mxu0 0.0
    %75 = vmatpush1.msra.mxu0 %v51
    %76 = vmatprep.subr.mxu0 0.0
    %77 = vmatpush1.msra.mxu0 %v52
    %78 = vmatprep.subr.mxu0 0.0
    %79 = vmatpush1.msra.mxu0 %v53
    %80 = vmatprep.subr.mxu0 0.0
    %81 = vmatpush1.msra.mxu0 %v54
    %82 = vmatprep.subr.mxu0 0.0
    %83 = vmatpush1.msra.mxu0 %v55
    %84 = vmatprep.subr.mxu0 0.0
    %85 = vmatpush1.msra.mxu0 %v56
    %86 = vmatprep.subr.mxu0 0.0
    %87 = vmatpush1.msra.mxu0 %v57
    %88 = vmatprep.subr.mxu0 0.0
    %89 = vmatpush1.msra.mxu0 %v58
    %90 = vmatprep.subr.mxu0 0.0
    %91 = vmatpush1.msra.mxu0 %v59
    %92 = vmatprep.subr.mxu0 0.0
    %93 = vmatpush1.msra.mxu0 %v60
    %94 = vmatprep.subr.mxu0 0.0
    %95 = vmatpush1.msra.mxu0 %v61
    %96 = vmatprep.subr.mxu0 0.0
    %97 = vmatpush1.msra.mxu0 %v62
    %98 = vmatprep.subr.mxu0 0.0
    %99 = vmatpush1.msra.mxu0 %v63
    %100 = vmatprep.subr.mxu0 0.0
    %101 = vmatpush1.msra.mxu0 %v64
    %102 = vmatprep.subr.mxu0 0.0
    %103 = vmatpush1.msra.mxu0 %v65
    %104 = vmatprep.subr.mxu0 0.0
    %105 = vmatpush1.msra.mxu0 %v66
    %106 = vmatprep.subr.mxu0 0.0
    %107 = vmatpush1.msra.mxu0 0.0
    %108 = vmatprep.subr.mxu0 0.0
    %109 = vmatpush1.msra.mxu0 0.0
    %110 = vmatprep.subr.mxu0 0.0
    %111 = vmatpush1.msra.mxu0 0.0
    %112 = vmatprep.subr.mxu0 0.0
    %113 = vmatpush1.msra.mxu0 0.0
    %114 = vmatprep.subr.mxu0 0.0
    %115 = vmatpush1.msra.mxu0 0.0
    %116 = vmatprep.subr.mxu0 0.0
    %117 = vmatpush1.msra.mxu0 0.0
    %118 = vmatprep.subr.mxu0 0.0
    %119 = vmatpush1.msra.mxu0 0.0
    %120 = vmatprep.subr.mxu0 0.0
    %121 = vmatpush1.msra.mxu0 0.0
    %122 = vmatprep.subr.mxu0 0.0
    %123 = vmatpush1.msra.mxu0 0.0
    %124 = vmatprep.subr.mxu0 0.0
    %125 = vmatpush1.msra.mxu0 0.0
    %126 = vmatprep.subr.mxu0 0.0
    %127 = vmatpush1.msra.mxu0 0.0
    %128 = vmatprep.subr.mxu0 0.0
    %129 = vmatpush1.msra.mxu0 0.0
    %130 = vmatprep.subr.mxu0 0.0
    %131 = vmatpush1.msra.mxu0 0.0
    %132 = vmatprep.subr.mxu0 0.0
    %133 = vmatpush1.msra.mxu0 0.0
    %134 = vmatprep.subr.mxu0 0.0
    %135 = vmatpush1.msra.mxu0 0.0
    %136 = vmatprep.subr.mxu0 0.0
    %137 = vmatpush1.msra.mxu0 0.0
    %138 = vmatprep.mubr.f32.mxu0 0.0
    %139 = vmatmul.mubr.f32.gmra.mrb[0].mxu0 %v49
    %v140 = vpop.f32.mrb[0].mxu0
    %v141 = vadd.f32 %v72, %v140
    %v142 = vpop.f32.mrb[0].mxu0
    %143 = vmatprep.mubr.f32.mxu0 0.0
    %144 = vmatmul.mubr.f32.gmra.mrb[0].mxu0 %v50
    %v145 = vpop.f32.mrb[0].mxu0
    %v146 = vadd.f32 %v72, %v145
    %v147 = vpop.f32.mrb[0].mxu0
    %148 = vdwg.mxu0
    %v149 = vadd.f32 %v141, %v49
    %v150 = vadd.f32 %v146, %v50
    %151 = vadd.xlane.f32.xlu0 %v149
    %v152 = vpop.xlane.xlu0 %151
    %153 = vadd.xlane.f32.xlu0 %v150
    %v154 = vpop.xlane.xlu0 %153
    %v155 = vmul.f32 %v152, 0.03125
    %v156 = vmul.f32 %v154, 0.03125
    %v157 = vsub.f32 %v149, %v155
    %v158 = vsub.f32 %v150, %v156
    %v159 = vlaneseq
    %v160 = vand.u32 %v159, 127
    %vm161 = vcmp.lt.s32.totalorder %v160, 32
    %v162 = vsel %vm161, 1, 0
    %vm163 = vcmp.eq.s32.totalorder %v162, 1
    %v164 = vsel %vm163, %v157, 0.0
    %v165 = vsel %vm163, %v158, 0.0
    %v166 = vmul.f32 %v164, %v164
    %v167 = vmul.f32 %v165, %v165
    %168 = vadd.xlane.f32.xlu0 %v166
    %v169 = vpop.xlane.xlu0 %168
    %170 = vadd.xlane.f32.xlu0 %v167
    %v171 = vpop.xlane.xlu0 %170
    %v172 = vmul.f32 %v169, 0.03125
    %v173 = vmul.f32 %v171, 0.03125
    %v174 = vadd.f32 %v172, 1e-05
    %v175 = vadd.f32 %v173, 1e-05
    %v176 = vrsqrt.pop %v174
    %v177 = vrsqrt.pop %v175
    %v178 = vmul.f32 %v157, %v176
    %v179 = vmul.f32 %v158, %v177
    %v180 = vld [vmem:[%s3] sm:$0x1]
    %v182 = vlaneseq
    %v183 = vshrl.u32 %v182, 7
    %v184 = vsub.s32 0, %v183
    %v185 = vrot.slane %v180, %v184
    %v187 = vmul.f32 %v178, %v185
    %v188 = vmul.f32 %v179, %v185
    %v189 = vld [vmem:[%s4] sm:$0x1]
    %v191 = vlaneseq
    %v192 = vshrl.u32 %v191, 7
    %v193 = vsub.s32 0, %v192
    %v194 = vrot.slane %v189, %v193
    %v196 = vadd.f32 %v187, %v194
    %v197 = vadd.f32 %v188, %v194
    %198 = vst [vmem:[#allocation7] sm:$0xff] %v196
    %199 = vst [vmem:[#allocation7 + $0x8] sm:$0xff] %v197
    // Predicated region
    $region30: #{tpu_custom_call.1} parent=1 // pred_check
      _
    $region31: #{tpu_custom_call.1} parent=1 // pred_check_branch
      %201 = sbr.rel (0) target = $region33
    $region32: #{tpu_custom_call.1} parent=1 // pred_region
      %s203 = ssub.s32 256, 256
      %204 = vsyncadd [#allocation4], %s203
      %s205 = sshll.u32 [#allocation7], 4
      %s206 = int_to_ptr.vmem [resolvable:$true] %s205
      %211 = dma.vmem_to_hbm [thread:$0]  %s206, 256, %s5, [#allocation4], 128, 128, 8
    $region33: #{tpu_custom_call.1} parent=1 // pred_fallthru
      _
    // Predicated region
    $region34: #{tpu_custom_call.1} parent=1 // pred_check
      _
    $region35: #{tpu_custom_call.1} parent=1 // pred_check_branch
      %213 = sbr.rel (0) target = $region37
    $region36: #{tpu_custom_call.1} parent=1 // pred_region
      %214 = dma.done [#allocation4], 256
    $region37: #{tpu_custom_call.1} parent=1 // pred_fallthru
      _
    %215 = vsyncpa [#allocation3], 1
    %216 = vsyncpa [#allocation6], 1
    %217 = vsyncpa [#allocation4], 1

</llo_original>
